<compile_context>
chip_gen: v7x
topology: tpu7x:2x2x1
jax: 0.10.0
libtpu: 0.0.40
codegen_flags: <defaults>
</compile_context>

<pallas_src>
import jax
import jax.numpy as jnp
from jax.experimental import pallas as pl
from jax.experimental.pallas import tpu as pltpu


def _fused_conv_kernel(w_ref, x_ref, o_ref):
    # [Cout, Cin+1] @ [Cin+1, M_pad] -> [Cout, M_pad].
    # Bias rides the last column of W / the all-ones last row of x, so a single
    # MXU pass produces the biased output; the store is full-lane (128) dense.
    o_ref[...] = jnp.dot(
        w_ref[...], x_ref[...], preferred_element_type=jnp.float32
    ).astype(o_ref.dtype)


def fused_1x1_conv_T(w_aug, x_aug):
    """w_aug: [Cout, Cin+1] f32 (folded weight, bias as last column);
    x_aug: [Cin+1, M_pad] f32 (activations with all-ones last row, M_pad a
    multiple of 128). Returns y^T: [Cout, M_pad]."""
    cout, kdim = w_aug.shape
    m_pad = x_aug.shape[1]
    flops = 2 * cout * kdim * m_pad
    bytes_accessed = (w_aug.size + x_aug.size + cout * m_pad) * 4
    return pl.pallas_call(
        _fused_conv_kernel,
        out_shape=jax.ShapeDtypeStruct((cout, m_pad), x_aug.dtype),
        # No grid: whole arrays live in VMEM, no pipeline scaffolding.
        in_specs=[
            pl.BlockSpec(memory_space=pltpu.MemorySpace.VMEM),
            pl.BlockSpec(memory_space=pltpu.MemorySpace.VMEM),
        ],
        out_specs=pl.BlockSpec(memory_space=pltpu.MemorySpace.VMEM),
        cost_estimate=pl.CostEstimate(
            flops=flops, transcendentals=0, bytes_accessed=bytes_accessed
        ),
        compiler_params=pltpu.CompilerParams(
            # Let XLA fuse the transpose/pad/ones-concat producers straight
            # into the Pallas operands instead of dispatching them separately.
            allow_input_fusion=[True, True],
        ),
    )(w_aug, x_aug)


@jax.jit
def already_sparse_forward(x_nchw, w_aug):
    """Forward matching the PyTorch module. x_nchw: [N, 16, H, W] f32;
    w_aug: [Cout, Cin+1] folded weight/bias (precomputed in make_params)."""
    n, c, h, w = x_nchw.shape
    m = n * h * w
    m_pad = max(128, ((m + 127) // 128) * 128)  # lane-dense padding

    # NCHW flattens directly to the transposed activation layout [Cin, M].
    xt = jnp.transpose(x_nchw, (1, 0, 2, 3)).reshape(c, m)
    xt = jnp.pad(xt, ((0, 0), (0, m_pad - m)))
    # Append an all-ones row so the folded bias (last column of w_aug) is
    # applied inside the same MXU pass. Padded columns get bias too but are
    # sliced off below, before the reshape back to NCHW.
    x_aug = jnp.concatenate([xt, jnp.ones((1, m_pad), xt.dtype)], axis=0)

    cout = w_aug.shape[0]
    y_t = fused_1x1_conv_T(w_aug, x_aug)[:, :m]          # [Cout, M]
    # [Cout, M] -> [Cout, N, H, W] -> NCHW
    return jnp.transpose(y_t.reshape(cout, n, h, w), (1, 0, 2, 3))


def make_params(key):
    """Parameter init mirroring the module, with the weight fold hoisted here.
       in_conv:  Conv2d(16, 64, 1x1) -> W1 [64,16], b1 [64] (default init)
       out_conv: Conv2d(64, 16, 1x1) -> W2 = ones with even *input* channels
                 zeroed (1:2 column sparsity by construction); b2 [16]."""
    k1, k2, k3 = jax.random.split(key, 3)
    cin, cmid, cout = 16, 64, 16

    # PyTorch default Conv2d init ~ U(-1/sqrt(fan_in), 1/sqrt(fan_in))
    bound1 = 1.0 / jnp.sqrt(float(cin))
    w1 = jax.random.uniform(k1, (cmid, cin), jnp.float32, -bound1, bound1)
    b1 = jax.random.uniform(k2, (cmid,), jnp.float32, -bound1, bound1)

    w2 = jnp.ones((cout, cmid), jnp.float32)
    w2 = w2.at[:, 0::2].set(0.0)
    bound2 = 1.0 / jnp.sqrt(float(cmid))
    b2 = jax.random.uniform(k3, (cout,), jnp.float32, -bound2, bound2)

    # Exact algebraic fold of in_conv followed by out_conv (both 1x1), in the
    # transposed layout used by the kernel (done ONCE, not per forward call):
    #   y^T = (W2 W1) x^T + (W2 b1 + b2)
    w_fused_t = jnp.dot(w2, w1, preferred_element_type=jnp.float32)      # [Cout, Cin]
    b_fused_t = (jnp.dot(w2, b1.reshape(cmid, 1),
                         preferred_element_type=jnp.float32)
                 + b2.reshape(cout, 1))                                  # [Cout, 1]
    w_aug = jnp.concatenate([w_fused_t, b_fused_t], axis=1)              # [Cout, Cin+1]

    return {"w1": w1, "b1": b1, "w2": w2, "b2": b2, "w_aug": w_aug}


if __name__ == "__main__":
    key = jax.random.PRNGKey(0)
    kx, kp = jax.random.split(key)

    # Module's declared input shape: [4, 16, 3, 3] (NCHW).
    x = jax.random.normal(kx, (4, 16, 3, 3), jnp.float32)
    params = make_params(kp)

    out = already_sparse_forward(x, params["w_aug"])
    out = jax.block_until_ready(out)

    # Reference in plain JAX using the ORIGINAL two-conv (unfused) formulation,
    # to confirm the precomputed weight fold + transposed layout are exact
    # (up to f32 re-association over the 64-wide hidden dim).
    h_ref = (jnp.einsum("nchw,kc->nkhw", x, params["w1"])
             + params["b1"].reshape(1, -1, 1, 1))
    y_ref = (jnp.einsum("nchw,kc->nkhw", h_ref, params["w2"])
             + params["b2"].reshape(1, -1, 1, 1))
    assert out.shape == (4, 16, 3, 3)
    assert jnp.allclose(out, y_ref, atol=1e-4, rtol=1e-4)

    print("KERNEL_OK")
</pallas_src>

<mosaic_0001>
module attributes {stable_mosaic.version = 11 : i64} {
  func.func @_fused_conv_kernel(%arg0: memref<16x17xf32, #tpu.memory_space<vmem>>, %arg1: memref<17x128xf32, #tpu.memory_space<vmem>>, %arg2: memref<16x128xf32, #tpu.memory_space<vmem>>) attributes {dimension_semantics = [], scalar_prefetch = 0 : i64, scratch_operands = 0 : i64, tpu.core_type = #tpu.core_type<tc>} {
    %c0 = arith.constant 0 : index
    %c0_0 = arith.constant 0 : index
    %0 = vector.load %arg0[%c0, %c0_0] : memref<16x17xf32, #tpu.memory_space<vmem>>, vector<16x17xf32>
    %c0_1 = arith.constant 0 : index
    %c0_2 = arith.constant 0 : index
    %1 = vector.load %arg1[%c0_1, %c0_2] : memref<17x128xf32, #tpu.memory_space<vmem>>, vector<17x128xf32>
    %cst = arith.constant dense<0.000000e+00> : vector<16x128xf32>
    %2 = tpu.matmul %0, %1, %cst {dimension_numbers = #tpu.dot_dimension_numbers<[1], [0], [0], [1], [0, 0, 1, 1], [], []>} : vector<16x17xf32>, vector<17x128xf32>, vector<16x128xf32> -> vector<16x128xf32>
    %c0_3 = arith.constant 0 : index
    %c0_4 = arith.constant 0 : index
    %3 = vector.load %arg2[%c0_3, %c0_4] : memref<16x128xf32, #tpu.memory_space<vmem>>, vector<16x128xf32>
    tpu.vector_store %arg2[%c0_3, %c0_4], %2 {strides = array<i32>} : memref<16x128xf32, #tpu.memory_space<vmem>>, vector<16x128xf32>,
    return
  }
}

</mosaic_0001>

<llo_original>
// kernel: already_sparse_forward.2
$region0: #{already_sparse_forward.2}
  #allocation0 [shape = 'u32[]', space=smem, size = 0x4, offset = 0x4, fixed_abs, tag = 'smem constant byte address 0x4 - core index']
  #allocation1 [shape = 'u32[144,128]{1,0:T(1,128)}', space=vmem, size = 0x12000, scoped, tag = 'internal scratch']
  #allocation2 [shape = 'u32[2048]{0}', space=vmem, size = 0x2000, scoped, tag = 'scoped memory for already_sparse_forward.2']
  #allocation3 [shape = 'u32[2048]{0}', space=vmem, size = 0x2000, scoped, tag = 'scoped memory for already_sparse_forward.2']
  #allocation4 [shape = 'u32[2048]{0}', space=vmem, size = 0x2000, scoped, tag = 'scoped memory for already_sparse_forward.2']
  #allocation5 [shape = 'u32[2048]{0}', space=vmem, size = 0x2000, scoped, tag = 'scoped memory for already_sparse_forward.2']
  #allocation6 [shape = 'u32[2048]{0}', space=vmem, size = 0x2000, scoped, tag = 'scoped memory for already_sparse_forward.2']
  %s0 = inlined_call_operand.vmem [shape: f32[16,17], index: 0, kind: input, shape index: {}]
  %s1 = inlined_call_operand.vmem [shape: f32[16,36], index: 1, kind: input, shape index: {}]
  %s2 = inlined_call_operand.<no memory space> [shape: f32[], index: 2, kind: input, shape index: {}]
  %s3 = inlined_call_operand.<no memory space> [shape: f32[], index: 3, kind: input, shape index: {}]
  %s4 = inlined_call_operand.<no memory space> [shape: s32[], index: 4, kind: input, shape index: {}]
  %s5 = inlined_call_operand.vmem [shape: f32[16,128], index: 5, kind: output, shape index: {}]
  %s6 = sld [smem:[#allocation0]]
  $region18: #{already_sparse_forward.2} parent=0
    _
  %s8 = ssub.s32 1, %s6
  %s9 = scalar_select 0, %s8, %s6
  %v10 = vstv %s2
  %v11 = vstv %s3
  %v12 = vstv %s4
  $region1: #{already_sparse_forward.2} parent=0
    #allocation7 [shape = 'u8[12288]{0}', space=vmem, size = 0x3000, dematerialized = true, scoped, tag = 'FusionAdapter Buffer %fusion.1 = f32[17,128]{1,0:T(8,128)} fusion(%param_1.9, %param_2.6, %param_3.8, %param_4.4), kind=kLoop, calls=%fused_computation.1.clone, metadata={op_name="jit(already_sparse_forward)/concatenate" stack_frame_id=10}']
    // Predicated region
    $region2: #{already_sparse_forward.2} parent=1 // pred_check
      _
    $region3: #{already_sparse_forward.2} parent=1 // pred_check_branch
      %14 = sbr.rel (0) target = $region5
    $region4: #{already_sparse_forward.2} parent=1 // pred_region
      _
    $region5: #{already_sparse_forward.2} parent=1 // pred_fallthru
      _
    // Predicated region
    $region6: #{already_sparse_forward.2} parent=1 // pred_check
      _
    $region7: #{already_sparse_forward.2} parent=1 // pred_check_branch
      %16 = sbr.rel (0) target = $region9
    $region8: #{already_sparse_forward.2} parent=1 // pred_region
      _
    $region9: #{already_sparse_forward.2} parent=1 // pred_fallthru
      _
    %v17 = vld [vmem:[%s1] sm:$0xff]
    %v18 = vlaneseq
    %v19 = vand.u32 %v18, 127
    %vm21 = vcmp.lt.s32.totalorder %v19, 36
    %v22 = vsel %vm21, %v17, %v10
    %v23 = vlaneseq
    %v24 = vshrl.u32 %v23, 7
    %27 = xla_tuple %v24, %v12
    %28 = xla_tuple %27
    %vm29 = vcmp.lt.s32.totalorder %v24, %v12
    %v30 = vsel %vm29, 1, 0
    %31 = xla_tuple %v30
    %32 = xla_tuple %v30, %v22, %v11
    %33 = xla_tuple %32
    %v34 = vsel %vm29, %v22, %v11
    %35 = xla_tuple %v34
    %37 = vst [vmem:[#allocation7] sm:$0xff] %v34
    %s38 = scalar_lea.vmem %s1, 8
    %v39 = vld [vmem:[%s38] sm:$0xff]
    %v40 = vlaneseq
    %v41 = vand.u32 %v40, 127
    %vm43 = vcmp.lt.s32.totalorder %v41, 36
    %v44 = vsel %vm43, %v39, %v10
    %v45 = vlaneseq
    %v46 = vshrl.u32 %v45, 7
    %v48 = vadd.s32 %v46, 8
    %49 = xla_tuple %v48, %v12
    %50 = xla_tuple %49
    %vm51 = vcmp.lt.s32.totalorder %v48, %v12
    %v52 = vsel %vm51, 1, 0
    %53 = xla_tuple %v52
    %54 = xla_tuple %v52, %v44, %v11
    %55 = xla_tuple %54
    %v56 = vsel %vm51, %v44, %v11
    %57 = xla_tuple %v56
    %s58 = scalar_lea.vmem [#allocation7], 8
    %60 = vst [vmem:[%s58] sm:$0xff] %v56
    %v61 = vlaneseq
    %v62 = vshrl.u32 %v61, 7
    %v64 = vadd.s32 %v62, 16
    %65 = xla_tuple %v64, %v12
    %66 = xla_tuple %65
    %vm67 = vcmp.lt.s32.totalorder %v64, %v12
    %v68 = vsel %vm67, 1, 0
    %69 = xla_tuple %v68
    %70 = xla_tuple %v68, %v10, %v11
    %71 = xla_tuple %70
    %v72 = vsel %vm67, %v10, %v11
    %73 = xla_tuple %v72
    %s74 = scalar_lea.vmem [#allocation7], 16
    %76 = vst [vmem:[%s74] sm:$0xff] %v72
    %v77 = vld [vmem:[%s0] sm:$0xff]
    %v78 = vld [vmem:[%s0 + $0x8] sm:$0xff]
    %v79 = vld [vmem:[#allocation7] sm:$0xff]
    %v80 = vld [vmem:[#allocation7 + $0x8] sm:$0xff]
    %v81 = vld [vmem:[#allocation7 + $0x10] sm:$0x1]
    %vm82 = vcmask 138240
    %v84 = vsel %vm82, %v77, 0
    %v87 = vsel %vm82, %v78, 0
    %vm89 = vcmask 1040384
    %v91 = vsel %vm89, %v81, 0
    %93 = vmatprep.subr.mxu0 0.0
    %94 = vmatpush1.msra.mxu0 %v79
    %95 = vmatprep.subr.mxu0 0.0
    %96 = vmatpush1.msra.mxu0 %v80
    %97 = vmatprep.subr.mxu0 0.0
    %98 = vmatpush1.msra.mxu0 %v91
    %99 = vmatprep.subr.mxu0 0.0
    %100 = vmatpush1.msra.mxu0 0.0
    %101 = vmatprep.subr.mxu0 0.0
    %102 = vmatpush1.msra.mxu0 0.0
    %103 = vmatprep.subr.mxu0 0.0
    %104 = vmatpush1.msra.mxu0 0.0
    %105 = vmatprep.subr.mxu0 0.0
    %106 = vmatpush1.msra.mxu0 0.0
    %107 = vmatprep.subr.mxu0 0.0
    %108 = vmatpush1.msra.mxu0 0.0
    %109 = vmatprep.subr.mxu0 0.0
    %110 = vmatpush1.msra.mxu0 0.0
    %111 = vmatprep.subr.mxu0 0.0
    %112 = vmatpush1.msra.mxu0 0.0
    %113 = vmatprep.subr.mxu0 0.0
    %114 = vmatpush1.msra.mxu0 0.0
    %115 = vmatprep.subr.mxu0 0.0
    %116 = vmatpush1.msra.mxu0 0.0
    %117 = vmatprep.subr.mxu0 0.0
    %118 = vmatpush1.msra.mxu0 0.0
    %119 = vmatprep.subr.mxu0 0.0
    %120 = vmatpush1.msra.mxu0 0.0
    %121 = vmatprep.subr.mxu0 0.0
    %122 = vmatpush1.msra.mxu0 0.0
    %123 = vmatprep.subr.mxu0 0.0
    %124 = vmatpush1.msra.mxu0 0.0
    %125 = vmatprep.subr.mxu0 0.0
    %126 = vmatpush1.msra.mxu0 0.0
    %127 = vmatprep.subr.mxu0 0.0
    %128 = vmatpush1.msra.mxu0 0.0
    %129 = vmatprep.subr.mxu0 0.0
    %130 = vmatpush1.msra.mxu0 0.0
    %131 = vmatprep.subr.mxu0 0.0
    %132 = vmatpush1.msra.mxu0 0.0
    %133 = vmatprep.subr.mxu0 0.0
    %134 = vmatpush1.msra.mxu0 0.0
    %135 = vmatprep.subr.mxu0 0.0
    %136 = vmatpush1.msra.mxu0 0.0
    %137 = vmatprep.subr.mxu0 0.0
    %138 = vmatpush1.msra.mxu0 0.0
    %139 = vmatprep.subr.mxu0 0.0
    %140 = vmatpush1.msra.mxu0 0.0
    %141 = vmatprep.subr.mxu0 0.0
    %142 = vmatpush1.msra.mxu0 0.0
    %143 = vmatprep.subr.mxu0 0.0
    %144 = vmatpush1.msra.mxu0 0.0
    %145 = vmatprep.subr.mxu0 0.0
    %146 = vmatpush1.msra.mxu0 0.0
    %147 = vmatprep.subr.mxu0 0.0
    %148 = vmatpush1.msra.mxu0 0.0
    %149 = vmatprep.subr.mxu0 0.0
    %150 = vmatpush1.msra.mxu0 0.0
    %151 = vmatprep.subr.mxu0 0.0
    %152 = vmatpush1.msra.mxu0 0.0
    %153 = vmatprep.subr.mxu0 0.0
    %154 = vmatpush1.msra.mxu0 0.0
    %155 = vmatprep.subr.mxu0 0.0
    %156 = vmatpush1.msra.mxu0 0.0
    %157 = vmatprep.mubr.f32.mxu0 0.0
    %158 = vmatmul.mubr.f32.gmra.mrb[0].mxu0 %v84
    %v159 = vpop.f32.mrb[0].mxu0
    %v160 = vadd.f32 0.0, %v159
    %v161 = vpop.f32.mrb[0].mxu0
    %162 = vmatprep.mubr.f32.mxu0 0.0
    %163 = vmatmul.mubr.f32.gmra.mrb[0].mxu0 %v87
    %v164 = vpop.f32.mrb[0].mxu0
    %v165 = vadd.f32 0.0, %v164
    %v166 = vpop.f32.mrb[0].mxu0
    %167 = vdwg.mxu0
    %168 = vst [vmem:[%s5] sm:$0xff] %v160
    %169 = vst [vmem:[%s5 + $0x8] sm:$0xff] %v165
    // Predicated region
    $region10: #{already_sparse_forward.2} parent=1 // pred_check
      _
    $region11: #{already_sparse_forward.2} parent=1 // pred_check_branch
      %171 = sbr.rel (0) target = $region13
    $region12: #{already_sparse_forward.2} parent=1 // pred_region
      _
    $region13: #{already_sparse_forward.2} parent=1 // pred_fallthru
      _
    // Predicated region
    $region14: #{already_sparse_forward.2} parent=1 // pred_check
      _
    $region15: #{already_sparse_forward.2} parent=1 // pred_check_branch
      %173 = sbr.rel (0) target = $region17
    $region16: #{already_sparse_forward.2} parent=1 // pred_region
      _
    $region17: #{already_sparse_forward.2} parent=1 // pred_fallthru
      _

</llo_original>
